<compile_context>
chip_gen: v7x
topology: tpu7x:2x2x1
jax: 0.10.0
libtpu: 0.0.40
codegen_flags: <defaults>
</compile_context>

<pallas_src>
from functools import partial

import numpy as np
import jax
import jax.numpy as jnp
from jax import lax
from jax.experimental import pallas as pl
from jax.experimental.pallas import tpu as pltpu

EPS = 1e-5


def _fold_group_sum(rows, cout, w):
    """Per-channel sum over the W folded lane-groups, replicated to every group.

    rows: (R, w*cout) f32.  Circular lane rolls by multiples of `cout` run on the XLU
    slot (idle here), replacing the former M=1 f32 pooling matmuls on the MXU.
    """
    if (w & (w - 1)) == 0:                    # power-of-two W: doubling tree, log2(W) steps
        s = rows
        shift = cout
        while shift < w * cout:
            s = s + pltpu.roll(s, shift=shift, axis=1)
            shift *= 2
        return s
    acc = rows                                 # general W: W-1 sequential roll-adds
    for k in range(1, w):
        acc = acc + pltpu.roll(rows, shift=k * cout, axis=1)
    return acc


def _resnet_block_kernel(x_ref,      # (B, H, W*Cin) f32, W folded into lanes
                         t_ref,      # (B, Tdim+1) f32, last column == 1 (bias input)
                         w1f_ref,    # (3*W*Cin, 2*W*Cout) bf16: [conv1 banded | residual]
                         w2f_ref,    # (3*W*Cout, W*Cout)  bf16: conv2 banded, K-stacked
                         wm_ref,     # (Tdim+1, 2*W*Cout) f32: [scale | shift] MLP, bias row
                         vec_ref,    # (8, W*Cout) f32: rows g1, be1, g2, be2, br, 0, 0, 0
                         out_ref,    # (B*H, W*Cout) f32 lane-dense output slab
                         a1_ref,     # scratch (B, H, 3*W*Cin)  f32: conv1 K-concat operand
                         a2_ref,     # scratch (B, H, 3*W*Cout) f32: conv2 K-concat operand
                         res_ref,    # scratch (B*H, W*Cout) f32: raw residual until final add
                         *, cout, w):
    B, H, WCin = x_ref.shape
    WC = out_ref.shape[-1]                     # W * Cout
    BH = B * H
    inv_n = 1.0 / (BH * w)                     # BN statistics are over (N, H, W)

    # ---- time-embedding MLP: ReLU -> Linear (bias via the appended ones column) ----
    t = jnp.maximum(t_ref[...], 0.0)           # relu(1) == 1 keeps the bias column intact
    emb = jnp.dot(t, wm_ref[...], preferred_element_type=jnp.float32)   # (B, 2*WC)
    film = emb[:, 0:WC] + 1.0                  # scale + 1
    shift_t = emb[:, WC:2 * WC]

    # ---- conv1 (+ residual fused along N): build K-concat operand, one MXU dot ----
    x = x_ref[...]
    zc = jnp.zeros((B, 1, WCin), jnp.float32)
    a1_ref[:, :, WCin:2 * WCin] = x                        # center tap (rows y)
    a1_ref[:, 1:H, 0:WCin] = x[:, 0:H - 1, :]              # rows y-1
    a1_ref[:, 0:1, 0:WCin] = zc                            # top halo
    a1_ref[:, 0:H - 1, 2 * WCin:3 * WCin] = x[:, 1:H, :]   # rows y+1
    a1_ref[:, H - 1:H, 2 * WCin:3 * WCin] = zc             # bottom halo

    a1 = a1_ref[...].reshape(BH, 3 * WCin).astype(jnp.bfloat16)
    d1 = jnp.dot(a1, w1f_ref[...], preferred_element_type=jnp.float32)  # (BH, 2*WC)
    h = d1[:, 0:WC]                                        # conv1 output (no bias: cancels in BN)
    res_ref[...] = d1[:, WC:2 * WC]                        # raw 1x1 residual, bias added at end

    # ---- BatchNorm #1 stats (single pass) via XLU roll-reduce, fused with FiLM + ReLU ----
    stats = jnp.concatenate([jnp.sum(h, axis=0, keepdims=True),
                             jnp.sum(h * h, axis=0, keepdims=True)], axis=0)   # (2, WC)
    stats = _fold_group_sum(stats, cout, w) * inv_n
    mean1 = stats[0:1, :]
    var1 = jnp.maximum(stats[1:2, :] - mean1 * mean1, 0.0)
    gs1 = vec_ref[0:1, :] * lax.rsqrt(var1 + EPS)          # g1 / std1   (EUP rsqrt)
    a_b = gs1 * film                                       # (B, WC) fused BN1+FiLM scale
    b_b = (vec_ref[1:2, :] - mean1 * gs1) * film + shift_t  # (B, WC) fused BN1+FiLM offset

    h3 = jnp.maximum(h.reshape(B, H, WC) * a_b[:, None, :] + b_b[:, None, :], 0.0)

    # ---- conv2: build K-concat operand, one MXU dot ----
    zr = jnp.zeros((B, 1, WC), jnp.float32)
    a2_ref[:, :, WC:2 * WC] = h3                           # center tap, lane-aligned full rows
    a2_ref[:, 1:H, 0:WC] = h3[:, 0:H - 1, :]               # rows y-1
    a2_ref[:, 0:1, 0:WC] = zr
    a2_ref[:, 0:H - 1, 2 * WC:3 * WC] = h3[:, 1:H, :]      # rows y+1
    a2_ref[:, H - 1:H, 2 * WC:3 * WC] = zr

    a2 = a2_ref[...].reshape(BH, 3 * WC).astype(jnp.bfloat16)
    h2 = jnp.dot(a2, w2f_ref[...], preferred_element_type=jnp.float32)  # (BH, WC)

    # ---- BatchNorm #2 (fused affine) + residual ----
    stats2 = jnp.concatenate([jnp.sum(h2, axis=0, keepdims=True),
                              jnp.sum(h2 * h2, axis=0, keepdims=True)], axis=0)
    stats2 = _fold_group_sum(stats2, cout, w) * inv_n
    mean2 = stats2[0:1, :]
    var2 = jnp.maximum(stats2[1:2, :] - mean2 * mean2, 0.0)
    gs2 = vec_ref[2:3, :] * lax.rsqrt(var2 + EPS)          # g2 / std2
    ofs = vec_ref[3:4, :] - mean2 * gs2 + vec_ref[4:5, :]  # be2 - mean2*g2/std2 + br

    out_ref[...] = h2 * gs2 + res_ref[...] + ofs           # full-lane store


def resnet_block_pallas(x_nhwc, t, p):
    B, H, W, Cin = x_nhwc.shape
    Cout = p['cout']
    WC = W * Cout
    WCin = W * Cin

    # wrapper-side layout plumbing only: fold W into lanes, append the MLP bias column.
    x_f = x_nhwc.reshape(B, H, WCin)
    t_aug = jnp.concatenate([t, jnp.ones((B, 1), t.dtype)], axis=1)

    ins = (x_f, t_aug, p['w1f'], p['w2f'], p['wm_aug'], p['vec'])

    def full_spec(a):
        n = a.ndim
        return pl.BlockSpec(a.shape, lambda i, n=n: (0,) * n)

    kernel = partial(_resnet_block_kernel, cout=Cout, w=W)

    grid_spec = pltpu.PrefetchScalarGridSpec(
        num_scalar_prefetch=0,
        grid=(1,),
        in_specs=[full_spec(a) for a in ins],
        out_specs=pl.BlockSpec((B * H, WC), lambda i: (0, 0)),
        scratch_shapes=[pltpu.VMEM((B, H, 3 * WCin), jnp.float32),
                        pltpu.VMEM((B, H, 3 * WC), jnp.float32),
                        pltpu.VMEM((B * H, WC), jnp.float32)])

    out2d = pl.pallas_call(
        kernel,
        out_shape=jax.ShapeDtypeStruct((B * H, WC), jnp.float32),
        grid_spec=grid_spec,
        compiler_params=pltpu.CompilerParams(
            dimension_semantics=("arbitrary",),
            vmem_limit_bytes=32 * 1024 * 1024),
    )(*ins)
    return out2d.reshape(B, H, W, Cout)


def init_params(key, dim, dim_out, time_emb_dim, W):
    ks = jax.random.split(key, 8)
    w1_hwio = 0.1 * jax.random.normal(ks[0], (3, 3, dim, dim_out), jnp.float32)
    b1 = 0.1 * jax.random.normal(ks[1], (dim_out,), jnp.float32)
    w2_hwio = 0.1 * jax.random.normal(ks[2], (3, 3, dim_out, dim_out), jnp.float32)
    b2 = 0.1 * jax.random.normal(ks[3], (dim_out,), jnp.float32)
    wm = 0.1 * jax.random.normal(ks[4], (time_emb_dim, dim_out * 2), jnp.float32)
    bm = 0.1 * jax.random.normal(ks[5], (dim_out * 2,), jnp.float32)
    wr = 0.1 * jax.random.normal(ks[6], (dim, dim_out), jnp.float32)
    br = 0.1 * jax.random.normal(ks[7], (dim_out,), jnp.float32)
    g1 = jnp.ones((dim_out,), jnp.float32); be1 = jnp.zeros((dim_out,), jnp.float32)
    g2 = jnp.ones((dim_out,), jnp.float32); be2 = jnp.zeros((dim_out,), jnp.float32)

    WCin = W * dim
    WC = W * dim_out

    def banded(w_dy):
        # w_dy: (3, cin, cout) dx taps for one row offset -> (W*cin, W*cout) banded matrix.
        # The clipped band implements the W-direction zero padding exactly.
        return sum(jnp.kron(jnp.eye(W, k=1 - dx, dtype=jnp.float32), w_dy[dx])
                   for dx in range(3))

    def tcol(v):        # (c,) -> (1, W*c) replicated across folded-W groups
        return jnp.tile(v.reshape(1, -1), (1, W))

    # conv1 banded weights K-stacked over dy; residual block-diag 1x1 weights N-fused
    # (nonzero only in the center-tap K rows).
    w1_k = jnp.concatenate([banded(w1_hwio[dy]) for dy in range(3)], axis=0)      # (3*WCin, WC)
    res_k = jnp.concatenate([jnp.zeros((WCin, WC), jnp.float32),
                             jnp.kron(jnp.eye(W, dtype=jnp.float32), wr),
                             jnp.zeros((WCin, WC), jnp.float32)], axis=0)         # (3*WCin, WC)
    w1f = jnp.concatenate([w1_k, res_k], axis=1).astype(jnp.bfloat16)             # (3*WCin, 2*WC)
    w2f = jnp.concatenate([banded(w2_hwio[dy]) for dy in range(3)],
                          axis=0).astype(jnp.bfloat16)                            # (3*WC, WC)

    # time-MLP: [scale | shift] columns fused along N, bias folded in as an extra row.
    wm_row = jnp.concatenate([jnp.tile(wm[:, :dim_out], (1, W)),
                              jnp.tile(wm[:, dim_out:], (1, W))], axis=1)         # (Tdim, 2*WC)
    bm_row = jnp.concatenate([tcol(bm[:dim_out]), tcol(bm[dim_out:])], axis=1)    # (1, 2*WC)
    wm_aug = jnp.concatenate([wm_row, bm_row], axis=0)                            # (Tdim+1, 2*WC)

    # all per-channel vectors the kernel needs, stacked into one (8, WC) array.
    # (conv biases b1/b2 cancel exactly under training-mode BatchNorm and are omitted.)
    vec = jnp.concatenate([tcol(g1), tcol(be1), tcol(g2), tcol(be2), tcol(br),
                           jnp.zeros((3, WC), jnp.float32)], axis=0)              # (8, WC)

    return dict(
        cout=dim_out,
        # raw parameters (used by the pure-JAX reference)
        w1_hwio=w1_hwio, w2_hwio=w2_hwio, b1=b1, b2=b2,
        wm=wm, bm=bm, wr=wr, br=br, g1=g1, be1=be1, g2=g2, be2=be2,
        # kernel-format parameters (banded / K-stacked / N-fused / lane-tiled)
        w1f=w1f, w2f=w2f, wm_aug=wm_aug, vec=vec,
    )


def _bn_train(h, gamma, beta):
    mean = jnp.mean(h, axis=(0, 1, 2), keepdims=True)
    var = jnp.mean((h - mean) ** 2, axis=(0, 1, 2), keepdims=True)
    return (h - mean) * lax.rsqrt(var + EPS) * gamma.reshape(1, 1, 1, -1) \
        + beta.reshape(1, 1, 1, -1)


def resnet_block_ref(x, t, p):
    # Pure-JAX reference (NHWC).  Conv / residual operands cast to bf16 to mirror the
    # kernel's bf16-MXU / f32-accumulation policy; everything else is f32.
    Cout = p['cout']
    emb = jnp.maximum(t, 0.0) @ p['wm'] + p['bm']
    scale, shift = emb[:, :Cout], emb[:, Cout:]
    dn = ('NHWC', 'HWIO', 'NHWC')
    xb = x.astype(jnp.bfloat16)
    h = lax.conv_general_dilated(xb, p['w1_hwio'].astype(jnp.bfloat16), (1, 1), 'SAME',
                                 dimension_numbers=dn,
                                 preferred_element_type=jnp.float32)
    h = h + p['b1'].reshape(1, 1, 1, -1)
    h = _bn_train(h, p['g1'], p['be1'])
    h = h * (scale[:, None, None, :] + 1.0) + shift[:, None, None, :]
    h = jnp.maximum(h, 0.0)
    h = lax.conv_general_dilated(h.astype(jnp.bfloat16),
                                 p['w2_hwio'].astype(jnp.bfloat16), (1, 1), 'SAME',
                                 dimension_numbers=dn,
                                 preferred_element_type=jnp.float32)
    h = h + p['b2'].reshape(1, 1, 1, -1)
    h = _bn_train(h, p['g2'], p['be2'])
    res = jnp.einsum('bhwi,io->bhwo', xb, p['wr'].astype(jnp.bfloat16),
                     preferred_element_type=jnp.float32) + p['br'].reshape(1, 1, 1, -1)
    return h + res


if __name__ == "__main__":
    B, Cin, Cout, H, W, Tdim = 2, 4, 8, 16, 16, 8
    key = jax.random.PRNGKey(0)
    kx, kt, kp = jax.random.split(key, 3)

    x_nchw = jax.random.normal(kx, (B, Cin, H, W), jnp.float32)      # PyTorch layout
    t_emb = jax.random.normal(kt, (B, Tdim), jnp.float32)
    params = init_params(kp, Cin, Cout, Tdim, W)

    x_nhwc = jnp.transpose(x_nchw, (0, 2, 3, 1))                     # kernel layout
    out_nhwc = resnet_block_pallas(x_nhwc, t_emb, params)
    out_nchw = jnp.transpose(out_nhwc, (0, 3, 1, 2))
    jax.block_until_ready(out_nchw)

    ref_nchw = jnp.transpose(resnet_block_ref(x_nhwc, t_emb, params), (0, 3, 1, 2))
    assert out_nchw.shape == (B, Cout, H, W)
    # bf16 MXU operands (kernel and reference) -> relaxed tolerance vs pure-f32 math.
    np.testing.assert_allclose(np.asarray(out_nchw), np.asarray(ref_nchw),
                               rtol=1e-2, atol=1e-2)
    print("KERNEL_OK")
</pallas_src>

<mosaic_0001>
module attributes {stable_mosaic.version = 11 : i64} {
  func.func @_resnet_block_kernel(%arg0: i32, %arg1: memref<2x16x64xf32, #tpu.memory_space<vmem>>, %arg2: memref<2x9xf32, #tpu.memory_space<vmem>>, %arg3: memref<192x256xbf16, #tpu.memory_space<vmem>>, %arg4: memref<384x128xbf16, #tpu.memory_space<vmem>>, %arg5: memref<9x256xf32, #tpu.memory_space<vmem>>, %arg6: memref<8x128xf32, #tpu.memory_space<vmem>>, %arg7: memref<32x128xf32, #tpu.memory_space<vmem>>, %arg8: memref<2x16x192xf32, #tpu.memory_space<vmem>>, %arg9: memref<2x16x384xf32, #tpu.memory_space<vmem>>, %arg10: memref<32x128xf32, #tpu.memory_space<vmem>>) attributes {dimension_semantics = [#tpu.dimension_semantics<arbitrary>], iteration_bounds = array<i64: 1>, scalar_prefetch = 0 : i64, scratch_operands = 3 : i64, tpu.core_type = #tpu.core_type<tc>, window_params = [{pipeline_mode = #tpu.pipeline_mode<synchronous>, transform_indices = @transform_0, window_bounds = array<i64: 2, 16, 64>}, {pipeline_mode = #tpu.pipeline_mode<synchronous>, transform_indices = @transform_1, window_bounds = array<i64: 2, 9>}, {pipeline_mode = #tpu.pipeline_mode<synchronous>, transform_indices = @transform_2, window_bounds = array<i64: 192, 256>}, {pipeline_mode = #tpu.pipeline_mode<synchronous>, transform_indices = @transform_3, window_bounds = array<i64: 384, 128>}, {pipeline_mode = #tpu.pipeline_mode<synchronous>, transform_indices = @transform_4, window_bounds = array<i64: 9, 256>}, {pipeline_mode = #tpu.pipeline_mode<synchronous>, transform_indices = @transform_5, window_bounds = array<i64: 8, 128>}, {pipeline_mode = #tpu.pipeline_mode<synchronous>, transform_indices = @transform_6, window_bounds = array<i64: 32, 128>}]} {
    %c0 = arith.constant 0 : index
    %c0_0 = arith.constant 0 : index
    %0 = vector.load %arg2[%c0, %c0_0] : memref<2x9xf32, #tpu.memory_space<vmem>>, vector<2x9xf32>
    %cst = arith.constant 0.000000e+00 : f32
    %1 = vector.broadcast %cst : f32 to vector<2x9xf32>
    %2 = arith.maximumf %0, %1 : vector<2x9xf32>
    %c0_1 = arith.constant 0 : index
    %c0_2 = arith.constant 0 : index
    %3 = vector.load %arg5[%c0_1, %c0_2] : memref<9x256xf32, #tpu.memory_space<vmem>>, vector<9x256xf32>
    %cst_3 = arith.constant dense<0.000000e+00> : vector<2x256xf32>
    %4 = tpu.matmul %2, %3, %cst_3 {dimension_numbers = #tpu.dot_dimension_numbers<[1], [0], [0], [1], [0, 0, 1, 1], [], []>} : vector<2x9xf32>, vector<9x256xf32>, vector<2x256xf32> -> vector<2x256xf32>
    %5 = vector.extract_strided_slice %4 {offsets = [0, 0], sizes = [2, 128], strides = [1, 1]} : vector<2x256xf32> to vector<2x128xf32>
    %cst_4 = arith.constant 1.000000e+00 : f32
    %6 = vector.broadcast %cst_4 : f32 to vector<2x128xf32>
    %7 = arith.addf %5, %6 : vector<2x128xf32>
    %8 = vector.extract_strided_slice %4 {offsets = [0, 128], sizes = [2, 128], strides = [1, 1]} : vector<2x256xf32> to vector<2x128xf32>
    %c0_5 = arith.constant 0 : index
    %c0_6 = arith.constant 0 : index
    %c0_7 = arith.constant 0 : index
    %9 = vector.load %arg1[%c0_5, %c0_6, %c0_7] : memref<2x16x64xf32, #tpu.memory_space<vmem>>, vector<2x16x64xf32>
    %cst_8 = arith.constant 0.000000e+00 : f32
    %10 = vector.broadcast %cst_8 : f32 to vector<2x1x64xf32>
    %c0_9 = arith.constant 0 : index
    %c0_10 = arith.constant 0 : index
    %c64 = arith.constant 64 : index
    %11 = vector.load %arg8[%c0_9, %c0_10, %c64] : memref<2x16x192xf32, #tpu.memory_space<vmem>>, vector<2x16x64xf32>
    tpu.vector_store %arg8[%c0_9, %c0_10, %c64], %9 {strides = array<i32>} : memref<2x16x192xf32, #tpu.memory_space<vmem>>, vector<2x16x64xf32>,
    %12 = vector.extract_strided_slice %9 {offsets = [0, 0, 0], sizes = [2, 15, 64], strides = [1, 1, 1]} : vector<2x16x64xf32> to vector<2x15x64xf32>
    %c0_11 = arith.constant 0 : index
    %c1 = arith.constant 1 : index
    %c0_12 = arith.constant 0 : index
    %13 = vector.load %arg8[%c0_11, %c1, %c0_12] : memref<2x16x192xf32, #tpu.memory_space<vmem>>, vector<2x15x64xf32>
    tpu.vector_store %arg8[%c0_11, %c1, %c0_12], %12 {strides = array<i32>} : memref<2x16x192xf32, #tpu.memory_space<vmem>>, vector<2x15x64xf32>,
    %c0_13 = arith.constant 0 : index
    %c0_14 = arith.constant 0 : index
    %c0_15 = arith.constant 0 : index
    %14 = vector.load %arg8[%c0_13, %c0_14, %c0_15] : memref<2x16x192xf32, #tpu.memory_space<vmem>>, vector<2x1x64xf32>
    tpu.vector_store %arg8[%c0_13, %c0_14, %c0_15], %10 {strides = array<i32>} : memref<2x16x192xf32, #tpu.memory_space<vmem>>, vector<2x1x64xf32>,
    %15 = vector.extract_strided_slice %9 {offsets = [0, 1, 0], sizes = [2, 15, 64], strides = [1, 1, 1]} : vector<2x16x64xf32> to vector<2x15x64xf32>
    %c0_16 = arith.constant 0 : index
    %c0_17 = arith.constant 0 : index
    %c128 = arith.constant 128 : index
    %16 = vector.load %arg8[%c0_16, %c0_17, %c128] : memref<2x16x192xf32, #tpu.memory_space<vmem>>, vector<2x15x64xf32>
    tpu.vector_store %arg8[%c0_16, %c0_17, %c128], %15 {strides = array<i32>} : memref<2x16x192xf32, #tpu.memory_space<vmem>>, vector<2x15x64xf32>,
    %c0_18 = arith.constant 0 : index
    %c15 = arith.constant 15 : index
    %c128_19 = arith.constant 128 : index
    %17 = vector.load %arg8[%c0_18, %c15, %c128_19] : memref<2x16x192xf32, #tpu.memory_space<vmem>>, vector<2x1x64xf32>
    tpu.vector_store %arg8[%c0_18, %c15, %c128_19], %10 {strides = array<i32>} : memref<2x16x192xf32, #tpu.memory_space<vmem>>, vector<2x1x64xf32>,
    %c0_20 = arith.constant 0 : index
    %c0_21 = arith.constant 0 : index
    %c0_22 = arith.constant 0 : index
    %18 = vector.load %arg8[%c0_20, %c0_21, %c0_22] : memref<2x16x192xf32, #tpu.memory_space<vmem>>, vector<2x16x192xf32>
    %19 = vector.shape_cast %18 : vector<2x16x192xf32> to vector<32x192xf32>
    %20 = arith.truncf %19 : vector<32x192xf32> to vector<32x192xbf16>
    %c0_23 = arith.constant 0 : index
    %c0_24 = arith.constant 0 : index
    %21 = vector.load %arg3[%c0_23, %c0_24] : memref<192x256xbf16, #tpu.memory_space<vmem>>, vector<192x256xbf16>
    %cst_25 = arith.constant dense<0.000000e+00> : vector<32x256xf32>
    %22 = tpu.matmul %20, %21, %cst_25 {dimension_numbers = #tpu.dot_dimension_numbers<[1], [0], [0], [1], [0, 0, 1, 1], [], []>} : vector<32x192xbf16>, vector<192x256xbf16>, vector<32x256xf32> -> vector<32x256xf32>
    %23 = vector.extract_strided_slice %22 {offsets = [0, 0], sizes = [32, 128], strides = [1, 1]} : vector<32x256xf32> to vector<32x128xf32>
    %24 = vector.extract_strided_slice %22 {offsets = [0, 128], sizes = [32, 128], strides = [1, 1]} : vector<32x256xf32> to vector<32x128xf32>
    %c0_26 = arith.constant 0 : index
    %c0_27 = arith.constant 0 : index
    %25 = vector.load %arg10[%c0_26, %c0_27] : memref<32x128xf32, #tpu.memory_space<vmem>>, vector<32x128xf32>
    tpu.vector_store %arg10[%c0_26, %c0_27], %24 {strides = array<i32>} : memref<32x128xf32, #tpu.memory_space<vmem>>, vector<32x128xf32>,
    %cst_28 = arith.constant dense<0.000000e+00> : vector<128xf32>
    %26 = vector.multi_reduction <add>, %23, %cst_28 [0] : vector<32x128xf32> to vector<128xf32>
    %27 = vector.shape_cast %26 : vector<128xf32> to vector<1x128xf32>
    %28 = arith.mulf %23, %23 : vector<32x128xf32>
    %cst_29 = arith.constant dense<0.000000e+00> : vector<128xf32>
    %29 = vector.multi_reduction <add>, %28, %cst_29 [0] : vector<32x128xf32> to vector<128xf32>
    %30 = vector.shape_cast %29 : vector<128xf32> to vector<1x128xf32>
    %31 = tpu.concatenate %27, %30 in 0 : vector<1x128xf32>, vector<1x128xf32> -> vector<2x128xf32>
    %c8_i32 = arith.constant 8 : i32
    %32 = tpu.dynamic_rotate %31 by %c8_i32 dim 1 : vector<2x128xf32>, i32 -> vector<2x128xf32>
    %33 = arith.addf %31, %32 : vector<2x128xf32>
    %c16_i32 = arith.constant 16 : i32
    %34 = tpu.dynamic_rotate %33 by %c16_i32 dim 1 : vector<2x128xf32>, i32 -> vector<2x128xf32>
    %35 = arith.addf %33, %34 : vector<2x128xf32>
    %c32_i32 = arith.constant 32 : i32
    %36 = tpu.dynamic_rotate %35 by %c32_i32 dim 1 : vector<2x128xf32>, i32 -> vector<2x128xf32>
    %37 = arith.addf %35, %36 : vector<2x128xf32>
    %c64_i32 = arith.constant 64 : i32
    %38 = tpu.dynamic_rotate %37 by %c64_i32 dim 1 : vector<2x128xf32>, i32 -> vector<2x128xf32>
    %39 = arith.addf %37, %38 : vector<2x128xf32>
    %cst_30 = arith.constant 0.001953125 : f32
    %40 = vector.broadcast %cst_30 : f32 to vector<2x128xf32>
    %41 = arith.mulf %39, %40 : vector<2x128xf32>
    %42 = vector.extract_strided_slice %41 {offsets = [0, 0], sizes = [1, 128], strides = [1, 1]} : vector<2x128xf32> to vector<1x128xf32>
    %43 = vector.extract_strided_slice %41 {offsets = [1, 0], sizes = [1, 128], strides = [1, 1]} : vector<2x128xf32> to vector<1x128xf32>
    %44 = arith.mulf %42, %42 : vector<1x128xf32>
    %45 = arith.subf %43, %44 : vector<1x128xf32>
    %cst_31 = arith.constant 0.000000e+00 : f32
    %46 = vector.broadcast %cst_31 : f32 to vector<1x128xf32>
    %47 = arith.maximumf %45, %46 : vector<1x128xf32>
    %c0_32 = arith.constant 0 : index
    %c0_33 = arith.constant 0 : index
    %48 = vector.load %arg6[%c0_32, %c0_33] : memref<8x128xf32, #tpu.memory_space<vmem>>, vector<1x128xf32>
    %cst_34 = arith.constant 9.99999974E-6 : f32
    %49 = vector.broadcast %cst_34 : f32 to vector<1x128xf32>
    %50 = arith.addf %47, %49 : vector<1x128xf32>
    %51 = math.rsqrt %50 : vector<1x128xf32>
    %52 = arith.mulf %48, %51 : vector<1x128xf32>
    %53 = vector.broadcast %52 : vector<1x128xf32> to vector<2x128xf32>
    %54 = arith.mulf %53, %7 : vector<2x128xf32>
    %c1_35 = arith.constant 1 : index
    %c0_36 = arith.constant 0 : index
    %55 = vector.load %arg6[%c1_35, %c0_36] : memref<8x128xf32, #tpu.memory_space<vmem>>, vector<1x128xf32>
    %56 = arith.mulf %42, %52 : vector<1x128xf32>
    %57 = arith.subf %55, %56 : vector<1x128xf32>
    %58 = vector.broadcast %57 : vector<1x128xf32> to vector<2x128xf32>
    %59 = arith.mulf %58, %7 : vector<2x128xf32>
    %60 = arith.addf %59, %8 : vector<2x128xf32>
    %61 = vector.shape_cast %23 : vector<32x128xf32> to vector<2x16x128xf32>
    %62 = vector.shape_cast %54 : vector<2x128xf32> to vector<2x1x128xf32>
    %63 = vector.broadcast %62 : vector<2x1x128xf32> to vector<2x16x128xf32>
    %64 = arith.mulf %61, %63 : vector<2x16x128xf32>
    %65 = vector.shape_cast %60 : vector<2x128xf32> to vector<2x1x128xf32>
    %66 = vector.broadcast %65 : vector<2x1x128xf32> to vector<2x16x128xf32>
    %67 = arith.addf %64, %66 : vector<2x16x128xf32>
    %cst_37 = arith.constant 0.000000e+00 : f32
    %68 = vector.broadcast %cst_37 : f32 to vector<2x16x128xf32>
    %69 = arith.maximumf %67, %68 : vector<2x16x128xf32>
    %cst_38 = arith.constant 0.000000e+00 : f32
    %70 = vector.broadcast %cst_38 : f32 to vector<2x1x128xf32>
    %c0_39 = arith.constant 0 : index
    %c0_40 = arith.constant 0 : index
    %c128_41 = arith.constant 128 : index
    %71 = vector.load %arg9[%c0_39, %c0_40, %c128_41] : memref<2x16x384xf32, #tpu.memory_space<vmem>>, vector<2x16x128xf32>
    tpu.vector_store %arg9[%c0_39, %c0_40, %c128_41], %69 {strides = array<i32>} : memref<2x16x384xf32, #tpu.memory_space<vmem>>, vector<2x16x128xf32>,
    %72 = vector.extract_strided_slice %69 {offsets = [0, 0, 0], sizes = [2, 15, 128], strides = [1, 1, 1]} : vector<2x16x128xf32> to vector<2x15x128xf32>
    %c0_42 = arith.constant 0 : index
    %c1_43 = arith.constant 1 : index
    %c0_44 = arith.constant 0 : index
    %73 = vector.load %arg9[%c0_42, %c1_43, %c0_44] : memref<2x16x384xf32, #tpu.memory_space<vmem>>, vector<2x15x128xf32>
    tpu.vector_store %arg9[%c0_42, %c1_43, %c0_44], %72 {strides = array<i32>} : memref<2x16x384xf32, #tpu.memory_space<vmem>>, vector<2x15x128xf32>,
    %c0_45 = arith.constant 0 : index
    %c0_46 = arith.constant 0 : index
    %c0_47 = arith.constant 0 : index
    %74 = vector.load %arg9[%c0_45, %c0_46, %c0_47] : memref<2x16x384xf32, #tpu.memory_space<vmem>>, vector<2x1x128xf32>
    tpu.vector_store %arg9[%c0_45, %c0_46, %c0_47], %70 {strides = array<i32>} : memref<2x16x384xf32, #tpu.memory_space<vmem>>, vector<2x1x128xf32>,
    %75 = vector.extract_strided_slice %69 {offsets = [0, 1, 0], sizes = [2, 15, 128], strides = [1, 1, 1]} : vector<2x16x128xf32> to vector<2x15x128xf32>
    %c0_48 = arith.constant 0 : index
    %c0_49 = arith.constant 0 : index
    %c256 = arith.constant 256 : index
    %76 = vector.load %arg9[%c0_48, %c0_49, %c256] : memref<2x16x384xf32, #tpu.memory_space<vmem>>, vector<2x15x128xf32>
    tpu.vector_store %arg9[%c0_48, %c0_49, %c256], %75 {strides = array<i32>} : memref<2x16x384xf32, #tpu.memory_space<vmem>>, vector<2x15x128xf32>,
    %c0_50 = arith.constant 0 : index
    %c15_51 = arith.constant 15 : index
    %c256_52 = arith.constant 256 : index
    %77 = vector.load %arg9[%c0_50, %c15_51, %c256_52] : memref<2x16x384xf32, #tpu.memory_space<vmem>>, vector<2x1x128xf32>
    tpu.vector_store %arg9[%c0_50, %c15_51, %c256_52], %70 {strides = array<i32>} : memref<2x16x384xf32, #tpu.memory_space<vmem>>, vector<2x1x128xf32>,
    %c0_53 = arith.constant 0 : index
    %c0_54 = arith.constant 0 : index
    %c0_55 = arith.constant 0 : index
    %78 = vector.load %arg9[%c0_53, %c0_54, %c0_55] : memref<2x16x384xf32, #tpu.memory_space<vmem>>, vector<2x16x384xf32>
    %79 = vector.shape_cast %78 : vector<2x16x384xf32> to vector<32x384xf32>
    %80 = arith.truncf %79 : vector<32x384xf32> to vector<32x384xbf16>
    %c0_56 = arith.constant 0 : index
    %c0_57 = arith.constant 0 : index
    %81 = vector.load %arg4[%c0_56, %c0_57] : memref<384x128xbf16, #tpu.memory_space<vmem>>, vector<384x128xbf16>
    %cst_58 = arith.constant dense<0.000000e+00> : vector<32x128xf32>
    %82 = tpu.matmul %80, %81, %cst_58 {dimension_numbers = #tpu.dot_dimension_numbers<[1], [0], [0], [1], [0, 0, 1, 1], [], []>} : vector<32x384xbf16>, vector<384x128xbf16>, vector<32x128xf32> -> vector<32x128xf32>
    %cst_59 = arith.constant dense<0.000000e+00> : vector<128xf32>
    %83 = vector.multi_reduction <add>, %82, %cst_59 [0] : vector<32x128xf32> to vector<128xf32>
    %84 = vector.shape_cast %83 : vector<128xf32> to vector<1x128xf32>
    %85 = arith.mulf %82, %82 : vector<32x128xf32>
    %cst_60 = arith.constant dense<0.000000e+00> : vector<128xf32>
    %86 = vector.multi_reduction <add>, %85, %cst_60 [0] : vector<32x128xf32> to vector<128xf32>
    %87 = vector.shape_cast %86 : vector<128xf32> to vector<1x128xf32>
    %88 = tpu.concatenate %84, %87 in 0 : vector<1x128xf32>, vector<1x128xf32> -> vector<2x128xf32>
    %c8_i32_61 = arith.constant 8 : i32
    %89 = tpu.dynamic_rotate %88 by %c8_i32_61 dim 1 : vector<2x128xf32>, i32 -> vector<2x128xf32>
    %90 = arith.addf %88, %89 : vector<2x128xf32>
    %c16_i32_62 = arith.constant 16 : i32
    %91 = tpu.dynamic_rotate %90 by %c16_i32_62 dim 1 : vector<2x128xf32>, i32 -> vector<2x128xf32>
    %92 = arith.addf %90, %91 : vector<2x128xf32>
    %c32_i32_63 = arith.constant 32 : i32
    %93 = tpu.dynamic_rotate %92 by %c32_i32_63 dim 1 : vector<2x128xf32>, i32 -> vector<2x128xf32>
    %94 = arith.addf %92, %93 : vector<2x128xf32>
    %c64_i32_64 = arith.constant 64 : i32
    %95 = tpu.dynamic_rotate %94 by %c64_i32_64 dim 1 : vector<2x128xf32>, i32 -> vector<2x128xf32>
    %96 = arith.addf %94, %95 : vector<2x128xf32>
    %cst_65 = arith.constant 0.001953125 : f32
    %97 = vector.broadcast %cst_65 : f32 to vector<2x128xf32>
    %98 = arith.mulf %96, %97 : vector<2x128xf32>
    %99 = vector.extract_strided_slice %98 {offsets = [0, 0], sizes = [1, 128], strides = [1, 1]} : vector<2x128xf32> to vector<1x128xf32>
    %100 = vector.extract_strided_slice %98 {offsets = [1, 0], sizes = [1, 128], strides = [1, 1]} : vector<2x128xf32> to vector<1x128xf32>
    %101 = arith.mulf %99, %99 : vector<1x128xf32>
    %102 = arith.subf %100, %101 : vector<1x128xf32>
    %cst_66 = arith.constant 0.000000e+00 : f32
    %103 = vector.broadcast %cst_66 : f32 to vector<1x128xf32>
    %104 = arith.maximumf %102, %103 : vector<1x128xf32>
    %c2 = arith.constant 2 : index
    %c0_67 = arith.constant 0 : index
    %105 = vector.load %arg6[%c2, %c0_67] : memref<8x128xf32, #tpu.memory_space<vmem>>, vector<1x128xf32>
    %cst_68 = arith.constant 9.99999974E-6 : f32
    %106 = vector.broadcast %cst_68 : f32 to vector<1x128xf32>
    %107 = arith.addf %104, %106 : vector<1x128xf32>
    %108 = math.rsqrt %107 : vector<1x128xf32>
    %109 = arith.mulf %105, %108 : vector<1x128xf32>
    %c3 = arith.constant 3 : index
    %c0_69 = arith.constant 0 : index
    %110 = vector.load %arg6[%c3, %c0_69] : memref<8x128xf32, #tpu.memory_space<vmem>>, vector<1x128xf32>
    %111 = arith.mulf %99, %109 : vector<1x128xf32>
    %112 = arith.subf %110, %111 : vector<1x128xf32>
    %c4 = arith.constant 4 : index
    %c0_70 = arith.constant 0 : index
    %113 = vector.load %arg6[%c4, %c0_70] : memref<8x128xf32, #tpu.memory_space<vmem>>, vector<1x128xf32>
    %114 = arith.addf %112, %113 : vector<1x128xf32>
    %115 = vector.broadcast %109 : vector<1x128xf32> to vector<32x128xf32>
    %116 = arith.mulf %82, %115 : vector<32x128xf32>
    %c0_71 = arith.constant 0 : index
    %c0_72 = arith.constant 0 : index
    %117 = vector.load %arg10[%c0_71, %c0_72] : memref<32x128xf32, #tpu.memory_space<vmem>>, vector<32x128xf32>
    %118 = arith.addf %116, %117 : vector<32x128xf32>
    %119 = vector.broadcast %114 : vector<1x128xf32> to vector<32x128xf32>
    %120 = arith.addf %118, %119 : vector<32x128xf32>
    %c0_73 = arith.constant 0 : index
    %c0_74 = arith.constant 0 : index
    %121 = vector.load %arg7[%c0_73, %c0_74] : memref<32x128xf32, #tpu.memory_space<vmem>>, vector<32x128xf32>
    tpu.vector_store %arg7[%c0_73, %c0_74], %120 {strides = array<i32>} : memref<32x128xf32, #tpu.memory_space<vmem>>, vector<32x128xf32>,
    return
  }
  func.func @transform_0(%arg0: i32) -> (i32, i32, i32) {
    %c0_i32 = arith.constant 0 : i32
    %c0_i32_0 = arith.constant 0 : i32
    %c0_i32_1 = arith.constant 0 : i32
    %c0_i32_2 = arith.constant 0 : i32
    return %c0_i32, %c0_i32_0, %c0_i32_1 : i32, i32, i32
  }
  func.func @transform_1(%arg0: i32) -> (i32, i32) {
    %c0_i32 = arith.constant 0 : i32
    %c0_i32_0 = arith.constant 0 : i32
    %c0_i32_1 = arith.constant 0 : i32
    return %c0_i32, %c0_i32_0 : i32, i32
  }
  func.func @transform_2(%arg0: i32) -> (i32, i32) {
    %c0_i32 = arith.constant 0 : i32
    %c0_i32_0 = arith.constant 0 : i32
    %c0_i32_1 = arith.constant 0 : i32
    return %c0_i32, %c0_i32_0 : i32, i32
  }
  func.func @transform_3(%arg0: i32) -> (i32, i32) {
    %c0_i32 = arith.constant 0 : i32
    %c0_i32_0 = arith.constant 0 : i32
    %c0_i32_1 = arith.constant 0 : i32
    return %c0_i32, %c0_i32_0 : i32, i32
  }
  func.func @transform_4(%arg0: i32) -> (i32, i32) {
    %c0_i32 = arith.constant 0 : i32
    %c0_i32_0 = arith.constant 0 : i32
    %c0_i32_1 = arith.constant 0 : i32
    return %c0_i32, %c0_i32_0 : i32, i32
  }
  func.func @transform_5(%arg0: i32) -> (i32, i32) {
    %c0_i32 = arith.constant 0 : i32
    %c0_i32_0 = arith.constant 0 : i32
    %c0_i32_1 = arith.constant 0 : i32
    return %c0_i32, %c0_i32_0 : i32, i32
  }
  func.func @transform_6(%arg0: i32) -> (i32, i32) {
    %c0_i32 = arith.constant 0 : i32
    %c0_i32_0 = arith.constant 0 : i32
    %c0_i32_1 = arith.constant 0 : i32
    return %c0_i32, %c0_i32_0 : i32, i32
  }
}

</mosaic_0001>

<llo_original>
// kernel: tpu_custom_call.1
$region0: #{tpu_custom_call.1}
  #allocation0 [shape = 'u32[]', space=smem, size = 0x4, offset = 0x4, fixed_abs, tag = 'smem constant byte address 0x4 - core index']
  #allocation1 [shape = 'u32[144,128]{1,0:T(1,128)}', space=vmem, size = 0x12000, scoped, tag = 'internal scratch']
  #allocation2 [shape = 'f32[2,16,192]{2,1,0:T(8,128)}', space=vmem, size = 0x8000, scoped, tag = 'scratch operand']
  #allocation3 [shape = 'f32[2,16,384]{2,1,0:T(8,128)}', space=vmem, size = 0xc000, scoped, tag = 'scratch operand']
  #allocation4 [shape = 'f32[32,128]{1,0:T(8,128)}', space=vmem, size = 0x4000, scoped, tag = 'scratch operand']
  %s0 = inlined_call_operand.hbm [shape: f32[2,16,64], index: 0, kind: input, shape index: {}]
  %s1 = inlined_call_operand.vmem [shape: f32[2,9], index: 1, kind: input, shape index: {}]
  %s2 = inlined_call_operand.hbm [shape: bf16[192,256], index: 2, kind: input, shape index: {}]
  %s3 = inlined_call_operand.hbm [shape: bf16[384,128], index: 3, kind: input, shape index: {}]
  %s4 = inlined_call_operand.hbm [shape: f32[9,256], index: 4, kind: input, shape index: {}]
  %s5 = inlined_call_operand.vmem [shape: f32[8,128], index: 5, kind: input, shape index: {}]
  %s6 = inlined_call_operand.hbm [shape: f32[32,128], index: 6, kind: output, shape index: {}]
  %s7 = sld [smem:[#allocation0]]
  $region50: #{tpu_custom_call.1} parent=0
    _
  %s9 = ssub.s32 1, %s7
  %s10 = scalar_select 0, %s9, %s7
  $region1: #{tpu_custom_call.1} parent=0
    #allocation5 [shape = 'u8[16384]{0}', space=vmem, size = 0x4000, scoped, tag = 'input window, operand 0, single buffered']
    #allocation6 [shape = 's32[1]{0}', space=sflag, size = 0x4, scoped, tag = 'scoped memory for tpu_custom_call.1']
    #allocation7 [shape = 's32[1]{0}', space=sflag, size = 0x4, scoped, tag = 'scoped memory for tpu_custom_call.1']
    #allocation8 [shape = 'u8[98304]{0}', space=vmem, size = 0x18000, scoped, tag = 'input window, operand 2, single buffered']
    #allocation9 [shape = 's32[1]{0}', space=sflag, size = 0x4, scoped, tag = 'scoped memory for tpu_custom_call.1']
    #allocation10 [shape = 'u8[98304]{0}', space=vmem, size = 0x18000, scoped, tag = 'input window, operand 3, single buffered']
    #allocation11 [shape = 'u8[16384]{0}', space=vmem, size = 0x4000, scoped, tag = 'input window, operand 4, single buffered']
    #allocation12 [shape = 's32[1]{0}', space=sflag, size = 0x4, scoped, tag = 'scoped memory for tpu_custom_call.1']
    #allocation13 [shape = 'u8[16384]{0}', space=vmem, size = 0x4000, scoped, tag = 'output window, operand 0, single buffered']
    %11 = vsyncpa [#allocation6], 0
    %12 = vsyncpa [#allocation9], 0
    %13 = vsyncpa [#allocation12], 0
    %14 = vsyncpa [#allocation7], 0
    // Predicated region
    $region2: #{tpu_custom_call.1} parent=1 // pred_check
      _
    $region3: #{tpu_custom_call.1} parent=1 // pred_check_branch
      %16 = sbr.rel (0) target = $region5
    $region4: #{tpu_custom_call.1} parent=1 // pred_region
      %s18 = ssub.s32 512, 512
      %19 = vsyncadd [#allocation6], %s18
      %s20 = sshll.u32 [#allocation5], 4
      %s21 = int_to_ptr.vmem [resolvable:$true] %s20
      %26 = dma.hbm_to_vmem [thread:$0]  %s0, 512, %s21, [#allocation6], 128, 128, 8
    $region5: #{tpu_custom_call.1} parent=1 // pred_fallthru
      _
    // Predicated region
    $region6: #{tpu_custom_call.1} parent=1 // pred_check
      _
    $region7: #{tpu_custom_call.1} parent=1 // pred_check_branch
      %28 = sbr.rel (0) target = $region9
    $region8: #{tpu_custom_call.1} parent=1 // pred_region
      _
    $region9: #{tpu_custom_call.1} parent=1 // pred_fallthru
      _
    // Predicated region
    $region10: #{tpu_custom_call.1} parent=1 // pred_check
      _
    $region11: #{tpu_custom_call.1} parent=1 // pred_check_branch
      %30 = sbr.rel (0) target = $region13
    $region12: #{tpu_custom_call.1} parent=1 // pred_region
      %s32 = ssub.s32 3072, 3072
      %33 = vsyncadd [#allocation9], %s32
      %s34 = sshll.u32 [#allocation8], 4
      %s35 = int_to_ptr.vmem [resolvable:$true] %s34
      %40 = dma.hbm_to_vmem [thread:$0]  %s2, 3072, %s35, [#allocation9], 128, 128, 8
    $region13: #{tpu_custom_call.1} parent=1 // pred_fallthru
      _
    // Predicated region
    $region14: #{tpu_custom_call.1} parent=1 // pred_check
      _
    $region15: #{tpu_custom_call.1} parent=1 // pred_check_branch
      %42 = sbr.rel (0) target = $region17
    $region16: #{tpu_custom_call.1} parent=1 // pred_region
      %s44 = ssub.s32 3072, 3072
      %45 = vsyncadd [#allocation9], %s44
      %s46 = sshll.u32 [#allocation10], 4
      %s47 = int_to_ptr.vmem [resolvable:$true] %s46
      %52 = dma.hbm_to_vmem [thread:$0]  %s3, 3072, %s47, [#allocation9], 64, 64, 4
    $region17: #{tpu_custom_call.1} parent=1 // pred_fallthru
      _
    // Predicated region
    $region18: #{tpu_custom_call.1} parent=1 // pred_check
      _
    $region19: #{tpu_custom_call.1} parent=1 // pred_check_branch
      %54 = sbr.rel (0) target = $region21
    $region20: #{tpu_custom_call.1} parent=1 // pred_region
      %s56 = ssub.s32 512, 512
      %57 = vsyncadd [#allocation12], %s56
      %s58 = sshll.u32 [#allocation11], 4
      %s59 = int_to_ptr.vmem [resolvable:$true] %s58
      %64 = dma.hbm_to_vmem [thread:$0]  %s4, 512, %s59, [#allocation12], 256, 256, 16
    $region21: #{tpu_custom_call.1} parent=1 // pred_fallthru
      _
    // Predicated region
    $region22: #{tpu_custom_call.1} parent=1 // pred_check
      _
    $region23: #{tpu_custom_call.1} parent=1 // pred_check_branch
      %66 = sbr.rel (0) target = $region25
    $region24: #{tpu_custom_call.1} parent=1 // pred_region
      _
    $region25: #{tpu_custom_call.1} parent=1 // pred_fallthru
      _
    // Predicated region
    $region26: #{tpu_custom_call.1} parent=1 // pred_check
      _
    $region27: #{tpu_custom_call.1} parent=1 // pred_check_branch
      %68 = sbr.rel (0) target = $region29
    $region28: #{tpu_custom_call.1} parent=1 // pred_region
      %69 = dma.done [#allocation6], 512
    $region29: #{tpu_custom_call.1} parent=1 // pred_fallthru
      _
    // Predicated region
    $region30: #{tpu_custom_call.1} parent=1 // pred_check
      _
    $region31: #{tpu_custom_call.1} parent=1 // pred_check_branch
      %71 = sbr.rel (0) target = $region33
    $region32: #{tpu_custom_call.1} parent=1 // pred_region
      %72 = dma.done [#allocation9], 3072
    $region33: #{tpu_custom_call.1} parent=1 // pred_fallthru
      _
    // Predicated region
    $region34: #{tpu_custom_call.1} parent=1 // pred_check
      _
    $region35: #{tpu_custom_call.1} parent=1 // pred_check_branch
      %74 = sbr.rel (0) target = $region37
    $region36: #{tpu_custom_call.1} parent=1 // pred_region
      %75 = dma.done [#allocation9], 3072
    $region37: #{tpu_custom_call.1} parent=1 // pred_fallthru
      _
    // Predicated region
    $region38: #{tpu_custom_call.1} parent=1 // pred_check
      _
    $region39: #{tpu_custom_call.1} parent=1 // pred_check_branch
      %77 = sbr.rel (0) target = $region41
    $region40: #{tpu_custom_call.1} parent=1 // pred_region
      %78 = dma.done [#allocation12], 512
    $region41: #{tpu_custom_call.1} parent=1 // pred_fallthru
      _
    %v80 = vld [vmem:[%s1] sm:$0x3]
    %v81 = vmax.f32 %v80, 0.0
    %v82 = vld [vmem:[#allocation11] sm:$0xff]
    %v83 = vld [vmem:[#allocation11 + $0x8] sm:$0xff]
    %v84 = vld [vmem:[#allocation11 + $0x10] sm:$0x1]
    %v85 = vld [vmem:[#allocation11 + $0x18] sm:$0x1]
    %vm86 = vcmask 72704
    %v88 = vsel %vm86, %v81, 0
    %vm90 = vcmask 1040384
    %v92 = vsel %vm90, %v84, 0
    %v95 = vsel %vm90, %v85, 0
    %97 = vmatprep.subr.mxu0 %v83
    %98 = vmatpush1.msra.mxu0 %v82
    %99 = vmatprep.subr.mxu0 %v95
    %100 = vmatpush1.msra.mxu0 %v92
    %101 = vmatprep.subr.mxu0 0.0
    %102 = vmatpush1.msra.mxu0 0.0
    %103 = vmatprep.subr.mxu0 0.0
    %104 = vmatpush1.msra.mxu0 0.0
    %105 = vmatprep.subr.mxu0 0.0
    %106 = vmatpush1.msra.mxu0 0.0
    %107 = vmatprep.subr.mxu0 0.0
    %108 = vmatpush1.msra.mxu0 0.0
    %109 = vmatprep.subr.mxu0 0.0
    %110 = vmatpush1.msra.mxu0 0.0
    %111 = vmatprep.subr.mxu0 0.0
    %112 = vmatpush1.msra.mxu0 0.0
    %113 = vmatprep.subr.mxu0 0.0
    %114 = vmatpush1.msra.mxu0 0.0
    %115 = vmatprep.subr.mxu0 0.0
    %116 = vmatpush1.msra.mxu0 0.0
    %117 = vmatprep.subr.mxu0 0.0
    %118 = vmatpush1.msra.mxu0 0.0
    %119 = vmatprep.subr.mxu0 0.0
    %120 = vmatpush1.msra.mxu0 0.0
    %121 = vmatprep.subr.mxu0 0.0
    %122 = vmatpush1.msra.mxu0 0.0
    %123 = vmatprep.subr.mxu0 0.0
    %124 = vmatpush1.msra.mxu0 0.0
    %125 = vmatprep.subr.mxu0 0.0
    %126 = vmatpush1.msra.mxu0 0.0
    %127 = vmatprep.subr.mxu0 0.0
    %128 = vmatpush1.msra.mxu0 0.0
    %129 = vmatprep.subr.mxu0 0.0
    %130 = vmatpush1.msra.mxu0 0.0
    %131 = vmatprep.subr.mxu0 0.0
    %132 = vmatpush1.msra.mxu0 0.0
    %133 = vmatprep.subr.mxu0 0.0
    %134 = vmatpush1.msra.mxu0 0.0
    %135 = vmatprep.subr.mxu0 0.0
    %136 = vmatpush1.msra.mxu0 0.0
    %137 = vmatprep.subr.mxu0 0.0
    %138 = vmatpush1.msra.mxu0 0.0
    %139 = vmatprep.subr.mxu0 0.0
    %140 = vmatpush1.msra.mxu0 0.0
    %141 = vmatprep.subr.mxu0 0.0
    %142 = vmatpush1.msra.mxu0 0.0
    %143 = vmatprep.subr.mxu0 0.0
    %144 = vmatpush1.msra.mxu0 0.0
    %145 = vmatprep.subr.mxu0 0.0
    %146 = vmatpush1.msra.mxu0 0.0
    %147 = vmatprep.subr.mxu0 0.0
    %148 = vmatpush1.msra.mxu0 0.0
    %149 = vmatprep.subr.mxu0 0.0
    %150 = vmatpush1.msra.mxu0 0.0
    %151 = vmatprep.subr.mxu0 0.0
    %152 = vmatpush1.msra.mxu0 0.0
    %153 = vmatprep.subr.mxu0 0.0
    %154 = vmatpush1.msra.mxu0 0.0
    %155 = vmatprep.subr.mxu0 0.0
    %156 = vmatpush1.msra.mxu0 0.0
    %157 = vmatprep.subr.mxu0 0.0
    %158 = vmatpush1.msra.mxu0 0.0
    %159 = vmatprep.subr.mxu0 0.0
    %160 = vmatpush1.msra.mxu0 0.0
    %161 = vmatprep.mubr.f32.mxu0 0.0
    %162 = vmatmul.mubr.f32.gmra.mrb[0].mxu0 %v88
    %v163 = vpop.f32.mrb[0].mxu0
    %v164 = vadd.f32 0.0, %v163
    %v165 = vpop.f32.mrb[0].mxu0
    %v166 = vadd.f32 0.0, %v165
    %167 = vdwg.mxu0
    %v168 = vadd.f32 %v164, 1.0
    %v169 = vld [vmem:[#allocation5] sm:$0xff]
    %v170 = vld [vmem:[#allocation5 + $0x8] sm:$0xff]
    %v171 = vld [vmem:[#allocation5 + $0x10] sm:$0xff]
    %v172 = vld [vmem:[#allocation5 + $0x18] sm:$0xff]
    %177 = vrot.lane.b32.xlu0 %v169, 64
    %v178 = vpop.permute.xlu0 %177
    %179 = vrot.lane.b32.xlu0 %v170, 64
    %v180 = vpop.permute.xlu0 %179
    %181 = vrot.lane.b32.xlu0 %v171, 64
    %v182 = vpop.permute.xlu0 %181
    %183 = vrot.lane.b32.xlu0 %v172, 64
    %v184 = vpop.permute.xlu0 %183
    %vm189 = vcmask 1048064
    %190 = vst.msk [vmem:[#allocation2] sm:$0xff] %vm189, %v178
    %191 = vst.msk [vmem:[#allocation2 + $0x10] sm:$0xff] %vm189, %v180
    %192 = vst.msk [vmem:[#allocation2 + $0x20] sm:$0xff] %vm189, %v182
    %193 = vst.msk [vmem:[#allocation2 + $0x30] sm:$0xff] %vm189, %v184
    %v194 = vrot.slane %v169, 7
    %v195 = vrot.slane %v170, 7
    %v196 = vsel %vm90, %v194, %v195
    %v197 = vrot.slane %v171, 7
    %v198 = vrot.slane %v172, 7
    %v199 = vsel %vm90, %v197, %v198
    %vm204 = vcmask 523265
    %205 = vst.msk [vmem:[#allocation2] sm:$0xfe] %vm204, %v194
    %vm206 = vcmask 523264
    %207 = vst.msk [vmem:[#allocation2 + $0x10] sm:$0xff] %vm206, %v196
    %208 = vst.msk [vmem:[#allocation2 + $0x20] sm:$0xfe] %vm204, %v197
    %209 = vst.msk [vmem:[#allocation2 + $0x30] sm:$0xff] %vm206, %v199
    %vm210 = vcmask 516096
    %211 = vst.msk [vmem:[#allocation2] sm:$0x1] %vm210, 0.0
    %212 = vst.msk [vmem:[#allocation2 + $0x20] sm:$0x1] %vm210, 0.0
    %vm213 = vcmask 1046528
    %v214 = vrot.slane %v169, 1
    %v215 = vrot.slane %v170, 1
    %v216 = vsel %vm213, %v214, %v215
    %v217 = vrot.slane %v171, 1
    %v218 = vrot.slane %v172, 1
    %v219 = vsel %vm213, %v217, %v218
    %224 = vst.msk [vmem:[#allocation2 + $0x8] sm:$0xff] %vm206, %v216
    %vm225 = vcmask 522240
    %226 = vst.msk [vmem:[#allocation2 + $0x18] sm:$0x7f] %vm225, %v215
    %227 = vst.msk [vmem:[#allocation2 + $0x28] sm:$0xff] %vm206, %v219
    %228 = vst.msk [vmem:[#allocation2 + $0x38] sm:$0x7f] %vm225, %v218
    %229 = vst.msk [vmem:[#allocation2 + $0x1f] sm:$0x1] %vm210, 0.0
    %230 = vst.msk [vmem:[#allocation2 + $0x3f] sm:$0x1] %vm210, 0.0
    %v231 = vld [vmem:[#allocation2] sm:$0xff]
    %v232 = vld [vmem:[#allocation2 + $0x8] sm:$0xff]
    %v233 = vld [vmem:[#allocation2 + $0x10] sm:$0xff]
    %v234 = vld [vmem:[#allocation2 + $0x18] sm:$0xff]
    %v235 = vld [vmem:[#allocation2 + $0x20] sm:$0xff]
    %v236 = vld [vmem:[#allocation2 + $0x28] sm:$0xff]
    %v237 = vld [vmem:[#allocation2 + $0x30] sm:$0xff]
    %v238 = vld [vmem:[#allocation2 + $0x38] sm:$0xff]
    %v239 = vpack.c.bf16 %v233, %v231
    %v240 = vpack.c.bf16 %v234, %v232
    %v241 = vpack.c.bf16 %v237, %v235
    %v242 = vpack.c.bf16 %v238, %v236
    %v243 = vld [vmem:[#allocation8] sm:$0xff]
    %v244 = vld [vmem:[#allocation8 + $0x8] sm:$0xff]
    %v245 = vld [vmem:[#allocation8 + $0x10] sm:$0xff]
    %v246 = vld [vmem:[#allocation8 + $0x18] sm:$0xff]
    %v247 = vld [vmem:[#allocation8 + $0x20] sm:$0xff]
    %v248 = vld [vmem:[#allocation8 + $0x28] sm:$0xff]
    %v249 = vld [vmem:[#allocation8 + $0x30] sm:$0xff]
    %v250 = vld [vmem:[#allocation8 + $0x38] sm:$0xff]
    %v251 = vld [vmem:[#allocation8 + $0x40] sm:$0xff]
    %v252 = vld [vmem:[#allocation8 + $0x48] sm:$0xff]
    %v253 = vld [vmem:[#allocation8 + $0x50] sm:$0xff]
    %v254 = vld [vmem:[#allocation8 + $0x58] sm:$0xff]
    %v255 = vld [vmem:[#allocation8 + $0x60] sm:$0xff]
    %v256 = vld [vmem:[#allocation8 + $0x68] sm:$0xff]
    %v257 = vld [vmem:[#allocation8 + $0x70] sm:$0xff]
    %v258 = vld [vmem:[#allocation8 + $0x78] sm:$0xff]
    %v259 = vld [vmem:[#allocation8 + $0x80] sm:$0xff]
    %v260 = vld [vmem:[#allocation8 + $0x88] sm:$0xff]
    %v261 = vld [vmem:[#allocation8 + $0x90] sm:$0xff]
    %v262 = vld [vmem:[#allocation8 + $0x98] sm:$0xff]
    %v263 = vld [vmem:[#allocation8 + $0xa0] sm:$0xff]
    %v264 = vld [vmem:[#allocation8 + $0xa8] sm:$0xff]
    %v265 = vld [vmem:[#allocation8 + $0xb0] sm:$0xff]
    %v266 = vld [vmem:[#allocation8 + $0xb8] sm:$0xff]
    %v291 = vunpack.c.l.b16 %v243
    %v292 = vunpack.c.h.b16 %v243
    %v293 = vunpack.c.l.b16 %v244
    %v294 = vunpack.c.h.b16 %v244
    %v295 = vunpack.c.l.b16 %v245
    %v296 = vunpack.c.h.b16 %v245
    %v297 = vunpack.c.l.b16 %v246
    %v298 = vunpack.c.h.b16 %v246
    %v299 = vunpack.c.l.b16 %v247
    %v300 = vunpack.c.h.b16 %v247
    %v301 = vunpack.c.l.b16 %v248
    %v302 = vunpack.c.h.b16 %v248
    %v303 = vunpack.c.l.b16 %v249
    %v304 = vunpack.c.h.b16 %v249
    %v305 = vunpack.c.l.b16 %v250
    %v306 = vunpack.c.h.b16 %v250
    %v307 = vunpack.c.l.b16 %v251
    %v308 = vunpack.c.h.b16 %v251
    %v309 = vunpack.c.l.b16 %v252
    %v310 = vunpack.c.h.b16 %v252
    %v311 = vunpack.c.l.b16 %v253
    %v312 = vunpack.c.h.b16 %v253
    %v313 = vunpack.c.l.b16 %v254
    %v314 = vunpack.c.h.b16 %v254
    %v315 = vunpack.c.l.b16 %v255
    %v316 = vunpack.c.h.b16 %v255
    %v317 = vunpack.c.l.b16 %v256
    %v318 = vunpack.c.h.b16 %v256
    %v319 = vunpack.c.l.b16 %v257
    %v320 = vunpack.c.h.b16 %v257
    %v321 = vunpack.c.l.b16 %v258
    %v322 = vunpack.c.h.b16 %v258
    %v323 = vunpack.c.l.b16 %v259
    %v324 = vunpack.c.h.b16 %v259
    %v325 = vunpack.c.l.b16 %v260
    %v326 = vunpack.c.h.b16 %v260
    %v327 = vunpack.c.l.b16 %v261
    %v328 = vunpack.c.h.b16 %v261
    %v329 = vunpack.c.l.b16 %v262
    %v330 = vunpack.c.h.b16 %v262
    %v331 = vunpack.c.l.b16 %v263
    %v332 = vunpack.c.h.b16 %v263
    %v333 = vunpack.c.l.b16 %v264
    %v334 = vunpack.c.h.b16 %v264
    %v335 = vunpack.c.l.b16 %v265
    %v336 = vunpack.c.h.b16 %v265
    %v337 = vunpack.c.l.b16 %v266
    %v338 = vunpack.c.h.b16 %v266
    %v339 = vpack.c.b16 %v293, %v291
    %v340 = vpack.c.b16 %v294, %v292
    %v341 = vpack.c.b16 %v297, %v295
    %v342 = vpack.c.b16 %v298, %v296
    %v343 = vpack.c.b16 %v301, %v299
    %v344 = vpack.c.b16 %v302, %v300
    %v345 = vpack.c.b16 %v305, %v303
    %v346 = vpack.c.b16 %v306, %v304
    %v347 = vpack.c.b16 %v309, %v307
    %v348 = vpack.c.b16 %v310, %v308
    %v349 = vpack.c.b16 %v313, %v311
    %v350 = vpack.c.b16 %v314, %v312
    %v351 = vpack.c.b16 %v317, %v315
    %v352 = vpack.c.b16 %v318, %v316
    %v353 = vpack.c.b16 %v321, %v319
    %v354 = vpack.c.b16 %v322, %v320
    %v355 = vpack.c.b16 %v325, %v323
    %v356 = vpack.c.b16 %v326, %v324
    %v357 = vpack.c.b16 %v329, %v327
    %v358 = vpack.c.b16 %v330, %v328
    %v359 = vpack.c.b16 %v333, %v331
    %v360 = vpack.c.b16 %v334, %v332
    %v361 = vpack.c.b16 %v337, %v335
    %v362 = vpack.c.b16 %v338, %v336
    %v388 = vsel %vm206, %v240, 0
    %v391 = vsel %vm206, %v242, 0
    %393 = vmatprep.subr.bf16.mxu0 %v340
    %394 = vmatpush1.bf16.msra.mxu0 %v339
    %395 = vmatprep.subr.bf16.mxu0 %v342
    %396 = vmatpush1.bf16.msra.mxu0 %v341
    %397 = vmatprep.subr.bf16.mxu0 %v344
    %398 = vmatpush1.bf16.msra.mxu0 %v343
    %399 = vmatprep.subr.bf16.mxu0 %v346
    %400 = vmatpush1.bf16.msra.mxu0 %v345
    %401 = vmatprep.subr.bf16.mxu0 %v348
    %402 = vmatpush1.bf16.msra.mxu0 %v347
    %403 = vmatprep.subr.bf16.mxu0 %v350
    %404 = vmatpush1.bf16.msra.mxu0 %v349
    %405 = vmatprep.subr.bf16.mxu0 %v352
    %406 = vmatpush1.bf16.msra.mxu0 %v351
    %407 = vmatprep.subr.bf16.mxu0 %v354
    %408 = vmatpush1.bf16.msra.mxu0 %v353
    %409 = vmatprep.subr.bf16.mxu0 %v356
    %410 = vmatpush1.bf16.msra.mxu0 %v355
    %411 = vmatprep.subr.bf16.mxu0 %v358
    %412 = vmatpush1.bf16.msra.mxu0 %v357
    %413 = vmatprep.subr.bf16.mxu0 %v360
    %414 = vmatpush1.bf16.msra.mxu0 %v359
    %415 = vmatprep.subr.bf16.mxu0 %v362
    %416 = vmatpush1.bf16.msra.mxu0 %v361
    %417 = vmatprep.subr.bf16.mxu0 0
    %418 = vmatpush1.bf16.msra.mxu0 0
    %419 = vmatprep.subr.bf16.mxu0 0
    %420 = vmatpush1.bf16.msra.mxu0 0
    %421 = vmatprep.subr.bf16.mxu0 0
    %422 = vmatpush1.bf16.msra.mxu0 0
    %423 = vmatprep.subr.bf16.mxu0 0
    %424 = vmatpush1.bf16.msra.mxu0 0
    %425 = vmatprep.mubr.bf16.mxu0 %v388
    %426 = vmatmul.mubr.bf16.gmra.mrb[0].mxu0 %v239
    %v427 = vpop.f32.mrb[0].mxu0
    %v428 = vadd.f32 0.0, %v427
    %v429 = vpop.f32.mrb[0].mxu0
    %v430 = vadd.f32 0.0, %v429
    %v431 = vpop.f32.mrb[0].mxu0
    %v432 = vadd.f32 0.0, %v431
    %v433 = vpop.f32.mrb[0].mxu0
    %v434 = vadd.f32 0.0, %v433
    %435 = vmatprep.mubr.bf16.mxu0 %v391
    %436 = vmatmul.mubr.bf16.gmra.mrb[0].mxu0 %v241
    %v437 = vpop.f32.mrb[0].mxu0
    %v438 = vadd.f32 0.0, %v437
    %v439 = vpop.f32.mrb[0].mxu0
    %v440 = vadd.f32 0.0, %v439
    %v441 = vpop.f32.mrb[0].mxu0
    %v442 = vadd.f32 0.0, %v441
    %v443 = vpop.f32.mrb[0].mxu0
    %v444 = vadd.f32 0.0, %v443
    %445 = vdwg.mxu0
    %446 = vst [vmem:[#allocation4] sm:$0xff] %v430
    %447 = vst [vmem:[#allocation4 + $0x8] sm:$0xff] %v434
    %448 = vst [vmem:[#allocation4 + $0x10] sm:$0xff] %v440
    %449 = vst [vmem:[#allocation4 + $0x18] sm:$0xff] %v444
    %v450 = vadd.f32 %v428, %v432
    %v451 = vadd.f32 %v450, %v438
    %v452 = vadd.f32 %v451, %v442
    %v453 = vrot.slane %v452, 4
    %v454 = vadd.f32 %v452, %v453
    %v455 = vrot.slane %v454, 2
    %v456 = vadd.f32 %v454, %v455
    %v457 = vrot.slane %v456, 1
    %v458 = vadd.f32 %v456, %v457
    %v459 = vmul.f32 %v428, %v428
    %v460 = vmul.f32 %v432, %v432
    %v461 = vmul.f32 %v438, %v438
    %v462 = vmul.f32 %v442, %v442
    %v463 = vadd.f32 %v459, %v460
    %v464 = vadd.f32 %v463, %v461
    %v465 = vadd.f32 %v464, %v462
    %v466 = vrot.slane %v465, 4
    %v467 = vadd.f32 %v465, %v466
    %v468 = vrot.slane %v467, 2
    %v469 = vadd.f32 %v467, %v468
    %v470 = vrot.slane %v469, 1
    %v471 = vadd.f32 %v469, %v470
    %v472 = vsel %vm90, %v458, %v471
    %473 = vrot.lane.b32.xlu0 %v472, 8
    %v474 = vpop.permute.xlu0 %473
    %v475 = vadd.f32 %v472, %v474
    %476 = vrot.lane.b32.xlu0 %v475, 16
    %v477 = vpop.permute.xlu0 %476
    %v478 = vadd.f32 %v475, %v477
    %479 = vrot.lane.b32.xlu0 %v478, 32
    %v480 = vpop.permute.xlu0 %479
    %v481 = vadd.f32 %v478, %v480
    %482 = vrot.lane.b32.xlu0 %v481, 64
    %v483 = vpop.permute.xlu0 %482
    %v484 = vadd.f32 %v481, %v483
    %v485 = vmul.f32 %v484, 0.001953125
    %v486 = vmul.f32 %v485, %v485
    %v488 = vrot.slane %v486, 7
    %v490 = vsub.f32 %v485, %v488
    %v491 = vmax.f32 %v490, 0.0
    %v492 = vld [vmem:[%s5] sm:$0x1]
    %v493 = vadd.f32 %v491, 1e-05
    %v494 = vrsqrt.pop %v493
    %v496 = vrot.slane %v494, 1
    %v498 = vmul.f32 %v492, %v496
    %v499 = vlaneseq
    %v500 = vshrl.u32 %v499, 7
    %v501 = vsub.s32 0, %v500
    %v502 = vrot.slane %v498, %v501
    %v503 = vmul.f32 %v502, %v168
    %v504 = vld [vmem:[%s5 + $0x1] sm:$0x1]
    %v505 = vmul.f32 %v485, %v498
    %v506 = vsub.f32 %v504, %v505
    %v507 = vlaneseq
    %v508 = vshrl.u32 %v507, 7
    %v509 = vsub.s32 0, %v508
    %v510 = vrot.slane %v506, %v509
    %v511 = vmul.f32 %v510, %v168
    %v512 = vadd.f32 %v511, %v166
    %v515 = vunpack.c.l.s4 1966171168
    %v516 = vunpack.c.0.s8 %v515
    %v517 = vlaneseq
    %v518 = vshrl.u32 %v517, 7
    %v519 = vsub.s32 %v516, %v518
    %v520 = vrot.slane %v503, %v519
    %v521 = vcombine.high %v520, %v520
    %v523 = vunpack.c.l.s4 1966171168
    %v524 = vunpack.c.0.s8 %v523
    %v525 = vlaneseq
    %v526 = vshrl.u32 %v525, 7
    %v527 = vsub.s32 %v524, %v526
    %v528 = vrot.slane %v520, %v527
    %v530 = vunpack.c.l.s4 1966171168
    %v531 = vunpack.c.0.s8 %v530
    %v532 = vlaneseq
    %v533 = vshrl.u32 %v532, 7
    %v534 = vsub.s32 %v531, %v533
    %v535 = vrot.slane %v521, %v534
    %v536 = vlaneseq
    %v537 = vshrl.u32 %v536, 7
    %v538 = vsub.s32 0, %v537
    %v539 = vrot.slane %v528, %v538
    %v540 = vlaneseq
    %v541 = vshrl.u32 %v540, 7
    %v542 = vsub.s32 0, %v541
    %v543 = vrot.slane %v535, %v542
    %v546 = vmul.f32 %v428, %v539
    %v547 = vmul.f32 %v432, %v539
    %v548 = vmul.f32 %v438, %v543
    %v549 = vmul.f32 %v442, %v543
    %v552 = vunpack.c.l.s4 1966171168
    %v553 = vunpack.c.0.s8 %v552
    %v554 = vlaneseq
    %v555 = vshrl.u32 %v554, 7
    %v556 = vsub.s32 %v553, %v555
    %v557 = vrot.slane %v512, %v556
    %v558 = vcombine.high %v557, %v557
    %v560 = vunpack.c.l.s4 1966171168
    %v561 = vunpack.c.0.s8 %v560
    %v562 = vlaneseq
    %v563 = vshrl.u32 %v562, 7
    %v564 = vsub.s32 %v561, %v563
    %v565 = vrot.slane %v557, %v564
    %v567 = vunpack.c.l.s4 1966171168
    %v568 = vunpack.c.0.s8 %v567
    %v569 = vlaneseq
    %v570 = vshrl.u32 %v569, 7
    %v571 = vsub.s32 %v568, %v570
    %v572 = vrot.slane %v558, %v571
    %v573 = vlaneseq
    %v574 = vshrl.u32 %v573, 7
    %v575 = vsub.s32 0, %v574
    %v576 = vrot.slane %v565, %v575
    %v577 = vlaneseq
    %v578 = vshrl.u32 %v577, 7
    %v579 = vsub.s32 0, %v578
    %v580 = vrot.slane %v572, %v579
    %v583 = vadd.f32 %v546, %v576
    %v584 = vadd.f32 %v547, %v576
    %v585 = vadd.f32 %v548, %v580
    %v586 = vadd.f32 %v549, %v580
    %v587 = vmax.f32 %v583, 0.0
    %v588 = vmax.f32 %v584, 0.0
    %v589 = vmax.f32 %v585, 0.0
    %v590 = vmax.f32 %v586, 0.0
    %591 = vst [vmem:[#allocation3 + $0x8] sm:$0xff] %v587
    %592 = vst [vmem:[#allocation3 + $0x20] sm:$0xff] %v588
    %593 = vst [vmem:[#allocation3 + $0x38] sm:$0xff] %v589
    %594 = vst [vmem:[#allocation3 + $0x50] sm:$0xff] %v590
    %v599 = vrot.slane %v587, 7
    %v600 = vrot.slane %v588, 7
    %v601 = vsel %vm90, %v599, %v600
    %v602 = vrot.slane %v589, 7
    %v603 = vrot.slane %v590, 7
    %v604 = vsel %vm90, %v602, %v603
    %609 = vst [vmem:[#allocation3] sm:$0xfe] %v599
    %610 = vst [vmem:[#allocation3 + $0x18] sm:$0xff] %v601
    %611 = vst [vmem:[#allocation3 + $0x30] sm:$0xfe] %v602
    %612 = vst [vmem:[#allocation3 + $0x48] sm:$0xff] %v604
    %613 = vst [vmem:[#allocation3] sm:$0x1] 0.0
    %614 = vst [vmem:[#allocation3 + $0x30] sm:$0x1] 0.0
    %v615 = vrot.slane %v587, 1
    %v616 = vrot.slane %v588, 1
    %v617 = vsel %vm213, %v615, %v616
    %v618 = vrot.slane %v589, 1
    %v619 = vrot.slane %v590, 1
    %v620 = vsel %vm213, %v618, %v619
    %625 = vst [vmem:[#allocation3 + $0x10] sm:$0xff] %v617
    %626 = vst [vmem:[#allocation3 + $0x28] sm:$0x7f] %v616
    %627 = vst [vmem:[#allocation3 + $0x40] sm:$0xff] %v620
    %628 = vst [vmem:[#allocation3 + $0x58] sm:$0x7f] %v619
    %629 = vst [vmem:[#allocation3 + $0x2f] sm:$0x1] 0.0
    %630 = vst [vmem:[#allocation3 + $0x5f] sm:$0x1] 0.0
    %v631 = vld [vmem:[#allocation3] sm:$0xff]
    %v632 = vld [vmem:[#allocation3 + $0x8] sm:$0xff]
    %v633 = vld [vmem:[#allocation3 + $0x10] sm:$0xff]
    %v634 = vld [vmem:[#allocation3 + $0x18] sm:$0xff]
    %v635 = vld [vmem:[#allocation3 + $0x20] sm:$0xff]
    %v636 = vld [vmem:[#allocation3 + $0x28] sm:$0xff]
    %v637 = vld [vmem:[#allocation3 + $0x30] sm:$0xff]
    %v638 = vld [vmem:[#allocation3 + $0x38] sm:$0xff]
    %v639 = vld [vmem:[#allocation3 + $0x40] sm:$0xff]
    %v640 = vld [vmem:[#allocation3 + $0x48] sm:$0xff]
    %v641 = vld [vmem:[#allocation3 + $0x50] sm:$0xff]
    %v642 = vld [vmem:[#allocation3 + $0x58] sm:$0xff]
    %v643 = vpack.c.bf16 %v634, %v631
    %v644 = vpack.c.bf16 %v635, %v632
    %v645 = vpack.c.bf16 %v636, %v633
    %v646 = vpack.c.bf16 %v640, %v637
    %v647 = vpack.c.bf16 %v641, %v638
    %v648 = vpack.c.bf16 %v642, %v639
    %v649 = vld [vmem:[#allocation10] sm:$0xf]
    %v650 = vld [vmem:[#allocation10 + $0x4] sm:$0xf]
    %v651 = vld [vmem:[#allocation10 + $0x8] sm:$0xf]
    %v652 = vld [vmem:[#allocation10 + $0xc] sm:$0xf]
    %v653 = vld [vmem:[#allocation10 + $0x10] sm:$0xf]
    %v654 = vld [vmem:[#allocation10 + $0x14] sm:$0xf]
    %v655 = vld [vmem:[#allocation10 + $0x18] sm:$0xf]
    %v656 = vld [vmem:[#allocation10 + $0x1c] sm:$0xf]
    %v657 = vld [vmem:[#allocation10 + $0x20] sm:$0xf]
    %v658 = vld [vmem:[#allocation10 + $0x24] sm:$0xf]
    %v659 = vld [vmem:[#allocation10 + $0x28] sm:$0xf]
    %v660 = vld [vmem:[#allocation10 + $0x2c] sm:$0xf]
    %v661 = vld [vmem:[#allocation10 + $0x30] sm:$0xf]
    %v662 = vld [vmem:[#allocation10 + $0x34] sm:$0xf]
    %v663 = vld [vmem:[#allocation10 + $0x38] sm:$0xf]
    %v664 = vld [vmem:[#allocation10 + $0x3c] sm:$0xf]
    %v665 = vld [vmem:[#allocation10 + $0x40] sm:$0xf]
    %v666 = vld [vmem:[#allocation10 + $0x44] sm:$0xf]
    %v667 = vld [vmem:[#allocation10 + $0x48] sm:$0xf]
    %v668 = vld [vmem:[#allocation10 + $0x4c] sm:$0xf]
    %v669 = vld [vmem:[#allocation10 + $0x50] sm:$0xf]
    %v670 = vld [vmem:[#allocation10 + $0x54] sm:$0xf]
    %v671 = vld [vmem:[#allocation10 + $0x58] sm:$0xf]
    %v672 = vld [vmem:[#allocation10 + $0x5c] sm:$0xf]
    %v673 = vld [vmem:[#allocation10 + $0x60] sm:$0xf]
    %v674 = vld [vmem:[#allocation10 + $0x64] sm:$0xf]
    %v675 = vld [vmem:[#allocation10 + $0x68] sm:$0xf]
    %v676 = vld [vmem:[#allocation10 + $0x6c] sm:$0xf]
    %v677 = vld [vmem:[#allocation10 + $0x70] sm:$0xf]
    %v678 = vld [vmem:[#allocation10 + $0x74] sm:$0xf]
    %v679 = vld [vmem:[#allocation10 + $0x78] sm:$0xf]
    %v680 = vld [vmem:[#allocation10 + $0x7c] sm:$0xf]
    %v681 = vld [vmem:[#allocation10 + $0x80] sm:$0xf]
    %v682 = vld [vmem:[#allocation10 + $0x84] sm:$0xf]
    %v683 = vld [vmem:[#allocation10 + $0x88] sm:$0xf]
    %v684 = vld [vmem:[#allocation10 + $0x8c] sm:$0xf]
    %v685 = vld [vmem:[#allocation10 + $0x90] sm:$0xf]
    %v686 = vld [vmem:[#allocation10 + $0x94] sm:$0xf]
    %v687 = vld [vmem:[#allocation10 + $0x98] sm:$0xf]
    %v688 = vld [vmem:[#allocation10 + $0x9c] sm:$0xf]
    %v689 = vld [vmem:[#allocation10 + $0xa0] sm:$0xf]
    %v690 = vld [vmem:[#allocation10 + $0xa4] sm:$0xf]
    %v691 = vld [vmem:[#allocation10 + $0xa8] sm:$0xf]
    %v692 = vld [vmem:[#allocation10 + $0xac] sm:$0xf]
    %v693 = vld [vmem:[#allocation10 + $0xb0] sm:$0xf]
    %v694 = vld [vmem:[#allocation10 + $0xb4] sm:$0xf]
    %v695 = vld [vmem:[#allocation10 + $0xb8] sm:$0xf]
    %v696 = vld [vmem:[#allocation10 + $0xbc] sm:$0xf]
    %v745 = vunpack.c.l.b16 %v649
    %v746 = vunpack.c.l.b16 %v650
    %v747 = vunpack.c.l.b16 %v651
    %v748 = vunpack.c.l.b16 %v652
    %v749 = vunpack.c.l.b16 %v653
    %v750 = vunpack.c.l.b16 %v654
    %v751 = vunpack.c.l.b16 %v655
    %v752 = vunpack.c.l.b16 %v656
    %v753 = vunpack.c.l.b16 %v657
    %v754 = vunpack.c.l.b16 %v658
    %v755 = vunpack.c.l.b16 %v659
    %v756 = vunpack.c.l.b16 %v660
    %v757 = vunpack.c.l.b16 %v661
    %v758 = vunpack.c.l.b16 %v662
    %v759 = vunpack.c.l.b16 %v663
    %v760 = vunpack.c.l.b16 %v664
    %v761 = vunpack.c.l.b16 %v665
    %v762 = vunpack.c.l.b16 %v666
    %v763 = vunpack.c.l.b16 %v667
    %v764 = vunpack.c.l.b16 %v668
    %v765 = vunpack.c.l.b16 %v669
    %v766 = vunpack.c.l.b16 %v670
    %v767 = vunpack.c.l.b16 %v671
    %v768 = vunpack.c.l.b16 %v672
    %v769 = vunpack.c.l.b16 %v673
    %v770 = vunpack.c.l.b16 %v674
    %v771 = vunpack.c.l.b16 %v675
    %v772 = vunpack.c.l.b16 %v676
    %v773 = vunpack.c.l.b16 %v677
    %v774 = vunpack.c.l.b16 %v678
    %v775 = vunpack.c.l.b16 %v679
    %v776 = vunpack.c.l.b16 %v680
    %v777 = vunpack.c.l.b16 %v681
    %v778 = vunpack.c.l.b16 %v682
    %v779 = vunpack.c.l.b16 %v683
    %v780 = vunpack.c.l.b16 %v684
    %v781 = vunpack.c.l.b16 %v685
    %v782 = vunpack.c.l.b16 %v686
    %v783 = vunpack.c.l.b16 %v687
    %v784 = vunpack.c.l.b16 %v688
    %v785 = vunpack.c.l.b16 %v689
    %v786 = vunpack.c.l.b16 %v690
    %v787 = vunpack.c.l.b16 %v691
    %v788 = vunpack.c.l.b16 %v692
    %v789 = vunpack.c.l.b16 %v693
    %v790 = vunpack.c.l.b16 %v694
    %v791 = vunpack.c.l.b16 %v695
    %v792 = vunpack.c.l.b16 %v696
    %v793 = vpack.c.b16 %v746, %v745
    %v794 = vpack.c.b16 %v748, %v747
    %v795 = vpack.c.b16 %v750, %v749
    %v796 = vpack.c.b16 %v752, %v751
    %v797 = vpack.c.b16 %v754, %v753
    %v798 = vpack.c.b16 %v756, %v755
    %v799 = vpack.c.b16 %v758, %v757
    %v800 = vpack.c.b16 %v760, %v759
    %v801 = vpack.c.b16 %v762, %v761
    %v802 = vpack.c.b16 %v764, %v763
    %v803 = vpack.c.b16 %v766, %v765
    %v804 = vpack.c.b16 %v768, %v767
    %v805 = vpack.c.b16 %v770, %v769
    %v806 = vpack.c.b16 %v772, %v771
    %v807 = vpack.c.b16 %v774, %v773
    %v808 = vpack.c.b16 %v776, %v775
    %v809 = vpack.c.b16 %v778, %v777
    %v810 = vpack.c.b16 %v780, %v779
    %v811 = vpack.c.b16 %v782, %v781
    %v812 = vpack.c.b16 %v784, %v783
    %v813 = vpack.c.b16 %v786, %v785
    %v814 = vpack.c.b16 %v788, %v787
    %v815 = vpack.c.b16 %v790, %v789
    %v816 = vpack.c.b16 %v792, %v791
    %841 = vmatprep.subr.bf16.mxu0 0
    %842 = vmatpush1.bf16.msra.mxu0 %v793
    %843 = vmatprep.subr.bf16.mxu0 0
    %844 = vmatpush1.bf16.msra.mxu0 %v794
    %845 = vmatprep.subr.bf16.mxu0 0
    %846 = vmatpush1.bf16.msra.mxu0 %v795
    %847 = vmatprep.subr.bf16.mxu0 0
    %848 = vmatpush1.bf16.msra.mxu0 %v796
    %849 = vmatprep.subr.bf16.mxu0 0
    %850 = vmatpush1.bf16.msra.mxu0 %v797
    %851 = vmatprep.subr.bf16.mxu0 0
    %852 = vmatpush1.bf16.msra.mxu0 %v798
    %853 = vmatprep.subr.bf16.mxu0 0
    %854 = vmatpush1.bf16.msra.mxu0 %v799
    %855 = vmatprep.subr.bf16.mxu0 0
    %856 = vmatpush1.bf16.msra.mxu0 %v800
    %857 = vmatprep.subr.bf16.mxu0 0
    %858 = vmatpush1.bf16.msra.mxu0 %v801
    %859 = vmatprep.subr.bf16.mxu0 0
    %860 = vmatpush1.bf16.msra.mxu0 %v802
    %861 = vmatprep.subr.bf16.mxu0 0
    %862 = vmatpush1.bf16.msra.mxu0 %v803
    %863 = vmatprep.subr.bf16.mxu0 0
    %864 = vmatpush1.bf16.msra.mxu0 %v804
    %865 = vmatprep.subr.bf16.mxu0 0
    %866 = vmatpush1.bf16.msra.mxu0 %v805
    %867 = vmatprep.subr.bf16.mxu0 0
    %868 = vmatpush1.bf16.msra.mxu0 %v806
    %869 = vmatprep.subr.bf16.mxu0 0
    %870 = vmatpush1.bf16.msra.mxu0 %v807
    %871 = vmatprep.subr.bf16.mxu0 0
    %872 = vmatpush1.bf16.msra.mxu0 %v808
    %873 = vmatprep.mubr.bf16.mxu0 %v644
    %874 = vmatmul.mubr.bf16.gmra.mrb[0].mxu0 %v643
    %v875 = vpop.f32.mrb[0].mxu0
    %v876 = vadd.f32 0.0, %v875
    %v877 = vpop.f32.mrb[0].mxu0
    %v878 = vpop.f32.mrb[0].mxu0
    %v879 = vadd.f32 0.0, %v878
    %v880 = vpop.f32.mrb[0].mxu0
    %881 = vmatprep.mubr.bf16.mxu0 %v647
    %882 = vmatmul.mubr.bf16.gmra.mrb[0].mxu0 %v646
    %v883 = vpop.f32.mrb[0].mxu0
    %v884 = vadd.f32 0.0, %v883
    %v885 = vpop.f32.mrb[0].mxu0
    %v886 = vpop.f32.mrb[0].mxu0
    %v887 = vadd.f32 0.0, %v886
    %v888 = vpop.f32.mrb[0].mxu0
    %889 = vdwg.mxu0
    %890 = vmatprep.subr.bf16.mxu0 0
    %891 = vmatpush1.bf16.msra.mxu0 %v809
    %892 = vmatprep.subr.bf16.mxu0 0
    %893 = vmatpush1.bf16.msra.mxu0 %v810
    %894 = vmatprep.subr.bf16.mxu0 0
    %895 = vmatpush1.bf16.msra.mxu0 %v811
    %896 = vmatprep.subr.bf16.mxu0 0
    %897 = vmatpush1.bf16.msra.mxu0 %v812
    %898 = vmatprep.subr.bf16.mxu0 0
    %899 = vmatpush1.bf16.msra.mxu0 %v813
    %900 = vmatprep.subr.bf16.mxu0 0
    %901 = vmatpush1.bf16.msra.mxu0 %v814
    %902 = vmatprep.subr.bf16.mxu0 0
    %903 = vmatpush1.bf16.msra.mxu0 %v815
    %904 = vmatprep.subr.bf16.mxu0 0
    %905 = vmatpush1.bf16.msra.mxu0 %v816
    %906 = vmatprep.subr.bf16.mxu0 0
    %907 = vmatpush1.bf16.msra.mxu0 0
    %908 = vmatprep.subr.bf16.mxu0 0
    %909 = vmatpush1.bf16.msra.mxu0 0
    %910 = vmatprep.subr.bf16.mxu0 0
    %911 = vmatpush1.bf16.msra.mxu0 0
    %912 = vmatprep.subr.bf16.mxu0 0
    %913 = vmatpush1.bf16.msra.mxu0 0
    %914 = vmatprep.subr.bf16.mxu0 0
    %915 = vmatpush1.bf16.msra.mxu0 0
    %916 = vmatprep.subr.bf16.mxu0 0
    %917 = vmatpush1.bf16.msra.mxu0 0
    %918 = vmatprep.subr.bf16.mxu0 0
    %919 = vmatpush1.bf16.msra.mxu0 0
    %920 = vmatprep.subr.bf16.mxu0 0
    %921 = vmatpush1.bf16.msra.mxu0 0
    %922 = vmatprep.mubr.bf16.mxu0 0
    %923 = vmatmul.mubr.bf16.gmra.mrb[0].mxu0 %v645
    %v924 = vpop.f32.mrb[0].mxu0
    %v925 = vadd.f32 %v876, %v924
    %v926 = vpop.f32.mrb[0].mxu0
    %v927 = vpop.f32.mrb[0].mxu0
    %v928 = vadd.f32 %v879, %v927
    %v929 = vpop.f32.mrb[0].mxu0
    %930 = vmatprep.mubr.bf16.mxu0 0
    %931 = vmatmul.mubr.bf16.gmra.mrb[0].mxu0 %v648
    %v932 = vpop.f32.mrb[0].mxu0
    %v933 = vadd.f32 %v884, %v932
    %v934 = vpop.f32.mrb[0].mxu0
    %v935 = vpop.f32.mrb[0].mxu0
    %v936 = vadd.f32 %v887, %v935
    %v937 = vpop.f32.mrb[0].mxu0
    %938 = vdwg.mxu0
    %v939 = vadd.f32 %v925, %v928
    %v940 = vadd.f32 %v939, %v933
    %v941 = vadd.f32 %v940, %v936
    %v942 = vrot.slane %v941, 4
    %v943 = vadd.f32 %v941, %v942
    %v944 = vrot.slane %v943, 2
    %v945 = vadd.f32 %v943, %v944
    %v946 = vrot.slane %v945, 1
    %v947 = vadd.f32 %v945, %v946
    %v948 = vmul.f32 %v925, %v925
    %v949 = vmul.f32 %v928, %v928
    %v950 = vmul.f32 %v933, %v933
    %v951 = vmul.f32 %v936, %v936
    %v952 = vadd.f32 %v948, %v949
    %v953 = vadd.f32 %v952, %v950
    %v954 = vadd.f32 %v953, %v951
    %v955 = vrot.slane %v954, 4
    %v956 = vadd.f32 %v954, %v955
    %v957 = vrot.slane %v956, 2
    %v958 = vadd.f32 %v956, %v957
    %v959 = vrot.slane %v958, 1
    %v960 = vadd.f32 %v958, %v959
    %v961 = vsel %vm90, %v947, %v960
    %962 = vrot.lane.b32.xlu0 %v961, 8
    %v963 = vpop.permute.xlu0 %962
    %v964 = vadd.f32 %v961, %v963
    %965 = vrot.lane.b32.xlu0 %v964, 16
    %v966 = vpop.permute.xlu0 %965
    %v967 = vadd.f32 %v964, %v966
    %968 = vrot.lane.b32.xlu0 %v967, 32
    %v969 = vpop.permute.xlu0 %968
    %v970 = vadd.f32 %v967, %v969
    %971 = vrot.lane.b32.xlu0 %v970, 64
    %v972 = vpop.permute.xlu0 %971
    %v973 = vadd.f32 %v970, %v972
    %v974 = vmul.f32 %v973, 0.001953125
    %v975 = vmul.f32 %v974, %v974
    %v977 = vrot.slane %v975, 7
    %v979 = vsub.f32 %v974, %v977
    %v980 = vmax.f32 %v979, 0.0
    %v981 = vld [vmem:[%s5 + $0x2] sm:$0x1]
    %v982 = vadd.f32 %v980, 1e-05
    %v983 = vrsqrt.pop %v982
    %v985 = vrot.slane %v983, 1
    %v987 = vmul.f32 %v981, %v985
    %v988 = vld [vmem:[%s5 + $0x3] sm:$0x1]
    %v989 = vmul.f32 %v974, %v987
    %v990 = vsub.f32 %v988, %v989
    %v991 = vld [vmem:[%s5 + $0x4] sm:$0x1]
    %v992 = vadd.f32 %v990, %v991
    %v993 = vlaneseq
    %v994 = vshrl.u32 %v993, 7
    %v995 = vsub.s32 0, %v994
    %v996 = vrot.slane %v987, %v995
    %v997 = vmul.f32 %v925, %v996
    %v998 = vmul.f32 %v928, %v996
    %v999 = vmul.f32 %v933, %v996
    %v1000 = vmul.f32 %v936, %v996
    %v1001 = vld [vmem:[#allocation4] sm:$0xff]
    %v1002 = vld [vmem:[#allocation4 + $0x8] sm:$0xff]
    %v1003 = vld [vmem:[#allocation4 + $0x10] sm:$0xff]
    %v1004 = vld [vmem:[#allocation4 + $0x18] sm:$0xff]
    %v1005 = vadd.f32 %v997, %v1001
    %v1006 = vadd.f32 %v998, %v1002
    %v1007 = vadd.f32 %v999, %v1003
    %v1008 = vadd.f32 %v1000, %v1004
    %v1009 = vlaneseq
    %v1010 = vshrl.u32 %v1009, 7
    %v1011 = vsub.s32 0, %v1010
    %v1012 = vrot.slane %v992, %v1011
    %v1013 = vadd.f32 %v1005, %v1012
    %v1014 = vadd.f32 %v1006, %v1012
    %v1015 = vadd.f32 %v1007, %v1012
    %v1016 = vadd.f32 %v1008, %v1012
    %1017 = vst [vmem:[#allocation13] sm:$0xff] %v1013
    %1018 = vst [vmem:[#allocation13 + $0x8] sm:$0xff] %v1014
    %1019 = vst [vmem:[#allocation13 + $0x10] sm:$0xff] %v1015
    %1020 = vst [vmem:[#allocation13 + $0x18] sm:$0xff] %v1016
    // Predicated region
    $region42: #{tpu_custom_call.1} parent=1 // pred_check
      _
    $region43: #{tpu_custom_call.1} parent=1 // pred_check_branch
      %1022 = sbr.rel (0) target = $region45
    $region44: #{tpu_custom_call.1} parent=1 // pred_region
      %s1024 = ssub.s32 512, 512
      %1025 = vsyncadd [#allocation7], %s1024
      %s1026 = sshll.u32 [#allocation13], 4
      %s1027 = int_to_ptr.vmem [resolvable:$true] %s1026
      %1032 = dma.vmem_to_hbm [thread:$0]  %s1027, 512, %s6, [#allocation7], 128, 128, 8
    $region45: #{tpu_custom_call.1} parent=1 // pred_fallthru
      _
    // Predicated region
    $region46: #{tpu_custom_call.1} parent=1 // pred_check
      _
    $region47: #{tpu_custom_call.1} parent=1 // pred_check_branch
      %1034 = sbr.rel (0) target = $region49
    $region48: #{tpu_custom_call.1} parent=1 // pred_region
      %1035 = dma.done [#allocation7], 512
    $region49: #{tpu_custom_call.1} parent=1 // pred_fallthru
      _
    %1036 = vsyncpa [#allocation6], 1
    %1037 = vsyncpa [#allocation9], 1
    %1038 = vsyncpa [#allocation12], 1
    %1039 = vsyncpa [#allocation7], 1

</llo_original>
